<compile_context>
chip_gen: v5e
topology: v5e:2x2
jax: 0.10.0
libtpu: 0.0.40
codegen_flags: <defaults>
</compile_context>

<pallas_src>
import jax
import jax.numpy as jnp
from jax.experimental import pallas as pl
from jax.experimental.pallas import tpu as pltpu

IN_FEATURES = 16
OUT_FEATURES = 7


def _linear_kernel(x_ref, w_ref, b_ref, o_ref):
    # x_ref: (TBF, 16r)  w_ref: (16r, 7r)  b_ref: (1, 7r)  o_ref: (TBF, 7r)
    y = jnp.dot(x_ref[...], w_ref[...], preferred_element_type=jnp.float32)
    o_ref[...] = (y + b_ref[...]).astype(o_ref.dtype)


def _round_up(v, m):
    return ((v + m - 1) // m) * m


def _padded_block_bytes(rows, cols, itemsize=4):
    # f32 VMEM blocks are laid out in (8, 128) tiles -> minor dims pad up.
    return _round_up(max(rows, 1), 8) * _round_up(cols, 128) * itemsize


def _default_fold_factor():
    # r=16 -> K=256 (one pass on v6e/v7x 256-wide MXU); r=8 keeps K=128 for
    # v5e's 128-wide MXU.  Minor once DMA-bound, but free to get right.
    try:
        if "v5" in jax.devices()[0].device_kind.lower():
            return 8
    except Exception:
        pass
    return 16


def softmax_classifier_forward(x, w, b, *, tile_b=65536, fold=None):
    """Compute x @ w.T + b with a lane-dense Pallas kernel.

    x: (B, 16) f32, w: (7, 16) f32, b: (7,) f32 -> (B, 7) f32.

    tile_b: max ORIGINAL batch rows per grid step.  With fold r the folded
    tile is (tile_b/r, 16r); at the 64K default that is ~12 MiB (r=16) /
    ~16 MiB (r=8) double-buffered of (8,128)-padded VMEM, which we request
    explicitly via vmem_limit_bytes (fits v5e/v6e 128 MiB and v7x 64 MiB).
    """
    B, F = x.shape
    O = w.shape[0]
    assert F == IN_FEATURES and O == OUT_FEATURES

    r = _default_fold_factor() if fold is None else int(fold)

    x = x.astype(jnp.float32)
    wt = jnp.asarray(w, jnp.float32).T                        # (16, 7)
    # Block-diagonal weight: r copies of wt on the diagonal -> (16r, 7r).
    wbd = jnp.kron(jnp.eye(r, dtype=jnp.float32), wt)         # (16r, 7r)
    bt = jnp.tile(jnp.asarray(b, jnp.float32), r).reshape(1, O * r)

    # Pad B only to the next multiple of the fold factor (<= r-1 rows); the
    # common case (B % r == 0) is a zero-copy reshape in and out.
    Bp = _round_up(B, r)
    x_in = x if Bp == B else jnp.pad(x, ((0, Bp - B), (0, 0)))

    Kf = F * r
    Nf = O * r
    Bf = Bp // r
    xf = x_in.reshape(Bf, Kf)        # free, contiguous view

    # Folded-row tile per grid step.
    if Bf <= 8:
        tbf = Bf                     # single block == full array dims (allowed)
    else:
        cap = max(8, ((max(tile_b, r) // r) // 8) * 8)
        # Keep >= 2 tiles so both TensorCores get work on v7x megacore.
        tbf = min(cap, _round_up(pl.cdiv(Bf, 2), 8))
    num_tiles = pl.cdiv(Bf, tbf)

    # Explicit scoped-VMEM budget from the real (lane-padded) footprint:
    # x + out double-buffered, weight/bias resident (counted x2 for slack).
    vmem_needed = (2 * _padded_block_bytes(tbf, Kf)
                   + 2 * _padded_block_bytes(tbf, Nf)
                   + 2 * _padded_block_bytes(Kf, Nf)
                   + 2 * _padded_block_bytes(1, Nf))
    vmem_limit = int(min(max(int(vmem_needed * 1.5), 4 << 20), 64 << 20))

    cost = pl.CostEstimate(
        flops=2 * Bf * Kf * Nf,
        transcendentals=0,
        bytes_accessed=(Bf * Kf + Kf * Nf + Nf + Bf * Nf) * 4,
    )

    out_f = pl.pallas_call(
        _linear_kernel,
        out_shape=jax.ShapeDtypeStruct((Bf, Nf), jnp.float32),
        grid_spec=pltpu.PrefetchScalarGridSpec(
            num_scalar_prefetch=0,
            grid=(num_tiles,),
            in_specs=[
                pl.BlockSpec((tbf, Kf), lambda i: (i, 0)),   # streamed x tiles
                pl.BlockSpec((Kf, Nf), lambda i: (0, 0)),    # resident weight
                pl.BlockSpec((1, Nf), lambda i: (0, 0)),     # resident bias
            ],
            out_specs=pl.BlockSpec((tbf, Nf), lambda i: (i, 0)),
        ),
        compiler_params=pltpu.CompilerParams(
            dimension_semantics=("parallel",),   # independent batch tiles
            vmem_limit_bytes=vmem_limit,
        ),
        cost_estimate=cost,
    )(xf, wbd, bt)

    out = out_f.reshape(Bp, O)       # free, contiguous view back to (Bp, 7)
    return out if Bp == B else out[:B]


if __name__ == "__main__":
    key = jax.random.PRNGKey(0)
    kx, kw, kb = jax.random.split(key, 3)

    B, F, O = 32, 16, 7
    x = jax.random.normal(kx, (B, F), dtype=jnp.float32)

    # Mimic nn.Linear init: uniform(-1/sqrt(F), 1/sqrt(F)).
    bound = 1.0 / jnp.sqrt(jnp.float32(F))
    w = jax.random.uniform(kw, (O, F), dtype=jnp.float32, minval=-bound, maxval=bound)
    b = jax.random.uniform(kb, (O,), dtype=jnp.float32, minval=-bound, maxval=bound)

    out = jax.block_until_ready(softmax_classifier_forward(x, w, b))
    ref = x @ w.T + b
    assert out.shape == (B, O)
    assert jnp.allclose(out, ref, atol=1e-5, rtol=1e-5)

    # B not a multiple of the fold factor -> small pad + output slice path.
    B2 = 20
    x2 = jax.random.normal(kx, (B2, F), dtype=jnp.float32)
    out2 = jax.block_until_ready(softmax_classifier_forward(x2, w, b))
    ref2 = x2 @ w.T + b
    assert out2.shape == (B2, O)
    assert jnp.allclose(out2, ref2, atol=1e-5, rtol=1e-5)

    # Multi-tile path with a ragged final block (exercises the pipeline).
    B3 = 400
    x3 = jax.random.normal(kx, (B3, F), dtype=jnp.float32)
    out3 = jax.block_until_ready(softmax_classifier_forward(x3, w, b, tile_b=128))
    ref3 = x3 @ w.T + b
    assert out3.shape == (B3, O)
    assert jnp.allclose(out3, ref3, atol=1e-5, rtol=1e-5)

    print("KERNEL_OK")
</pallas_src>

<mosaic_0001>
module attributes {stable_mosaic.version = 11 : i64} {
  func.func @_linear_kernel(%arg0: i32, %arg1: memref<2x256xf32, #tpu.memory_space<vmem>>, %arg2: memref<256x112xf32, #tpu.memory_space<vmem>>, %arg3: memref<1x112xf32, #tpu.memory_space<vmem>>, %arg4: memref<2x112xf32, #tpu.memory_space<vmem>>) attributes {dimension_semantics = [#tpu.dimension_semantics<parallel>], iteration_bounds = array<i64: 1>, scalar_prefetch = 0 : i64, scratch_operands = 0 : i64, tpu.core_type = #tpu.core_type<tc>, window_params = [{transform_indices = @transform_0, window_bounds = array<i64: 2, 256>}, {pipeline_mode = #tpu.pipeline_mode<synchronous>, transform_indices = @transform_1, window_bounds = array<i64: 256, 112>}, {pipeline_mode = #tpu.pipeline_mode<synchronous>, transform_indices = @transform_2, window_bounds = array<i64: 1, 112>}, {transform_indices = @transform_3, window_bounds = array<i64: 2, 112>}]} {
    %c0 = arith.constant 0 : index
    %c0_0 = arith.constant 0 : index
    %0 = vector.load %arg1[%c0, %c0_0] : memref<2x256xf32, #tpu.memory_space<vmem>>, vector<2x256xf32>
    %c0_1 = arith.constant 0 : index
    %c0_2 = arith.constant 0 : index
    %1 = vector.load %arg2[%c0_1, %c0_2] : memref<256x112xf32, #tpu.memory_space<vmem>>, vector<256x112xf32>
    %cst = arith.constant dense<0.000000e+00> : vector<2x112xf32>
    %2 = tpu.matmul %0, %1, %cst {dimension_numbers = #tpu.dot_dimension_numbers<[1], [0], [0], [1], [0, 0, 1, 1], [], []>} : vector<2x256xf32>, vector<256x112xf32>, vector<2x112xf32> -> vector<2x112xf32>
    %c0_3 = arith.constant 0 : index
    %c0_4 = arith.constant 0 : index
    %3 = vector.load %arg3[%c0_3, %c0_4] : memref<1x112xf32, #tpu.memory_space<vmem>>, vector<1x112xf32>
    %4 = vector.broadcast %3 : vector<1x112xf32> to vector<2x112xf32>
    %5 = arith.addf %2, %4 : vector<2x112xf32>
    %c0_5 = arith.constant 0 : index
    %c0_6 = arith.constant 0 : index
    %6 = vector.load %arg4[%c0_5, %c0_6] : memref<2x112xf32, #tpu.memory_space<vmem>>, vector<2x112xf32>
    tpu.vector_store %arg4[%c0_5, %c0_6], %5 {strides = array<i32>} : memref<2x112xf32, #tpu.memory_space<vmem>>, vector<2x112xf32>,
    return
  }
  func.func @transform_0(%arg0: i32) -> (i32, i32) {
    %c0_i32 = arith.constant 0 : i32
    %c0_i32_0 = arith.constant 0 : i32
    return %arg0, %c0_i32 : i32, i32
  }
  func.func @transform_1(%arg0: i32) -> (i32, i32) {
    %c0_i32 = arith.constant 0 : i32
    %c0_i32_0 = arith.constant 0 : i32
    %c0_i32_1 = arith.constant 0 : i32
    return %c0_i32, %c0_i32_0 : i32, i32
  }
  func.func @transform_2(%arg0: i32) -> (i32, i32) {
    %c0_i32 = arith.constant 0 : i32
    %c0_i32_0 = arith.constant 0 : i32
    %c0_i32_1 = arith.constant 0 : i32
    return %c0_i32, %c0_i32_0 : i32, i32
  }
  func.func @transform_3(%arg0: i32) -> (i32, i32) {
    %c0_i32 = arith.constant 0 : i32
    %c0_i32_0 = arith.constant 0 : i32
    return %arg0, %c0_i32 : i32, i32
  }
}

</mosaic_0001>

<llo_original>
// kernel: tpu_custom_call.1
$region0: #{tpu_custom_call.1}
  #allocation0 [shape = 'u32[]', space=smem, size = 0x4, offset = 0x4, fixed_abs, tag = 'smem constant byte address 0x4 - core index']
  #allocation1 [shape = 'u32[72,128]{1,0:T(1,128)}', space=vmem, size = 0x9000, scoped, tag = 'internal scratch']
  %s0 = inlined_call_operand.vmem [shape: f32[2,256], index: 0, kind: input, shape index: {}]
  %s1 = inlined_call_operand.vmem [shape: f32[256,112], index: 1, kind: input, shape index: {}]
  %s2 = inlined_call_operand.vmem [shape: f32[1,112], index: 2, kind: input, shape index: {}]
  %s3 = inlined_call_operand.hbm [shape: f32[2,112], index: 3, kind: output, shape index: {}]
  %s4 = sld [smem:[#allocation0]]
  $region22: #{tpu_custom_call.1} parent=0
    _
  %s6 = ssub.s32 1, %s4
  %s7 = scalar_select 0, %s6, %s4
  $region1: #{tpu_custom_call.1} parent=0
    #allocation2 [shape = 'u8[1024]{0}', space=vmem, size = 0x400, scoped, tag = 'output window, operand 0, single buffered']
    #allocation3 [shape = 's32[1]{0}', space=sflag, size = 0x4, scoped, tag = 'scoped memory for tpu_custom_call.1']
    %8 = vsyncpa [#allocation3], 0
    // Predicated region
    $region2: #{tpu_custom_call.1} parent=1 // pred_check
      _
    $region3: #{tpu_custom_call.1} parent=1 // pred_check_branch
      %10 = sbr.rel (0) target = $region5
    $region4: #{tpu_custom_call.1} parent=1 // pred_region
      _
    $region5: #{tpu_custom_call.1} parent=1 // pred_fallthru
      _
    // Predicated region
    $region6: #{tpu_custom_call.1} parent=1 // pred_check
      _
    $region7: #{tpu_custom_call.1} parent=1 // pred_check_branch
      %12 = sbr.rel (0) target = $region9
    $region8: #{tpu_custom_call.1} parent=1 // pred_region
      _
    $region9: #{tpu_custom_call.1} parent=1 // pred_fallthru
      _
    // Predicated region
    $region10: #{tpu_custom_call.1} parent=1 // pred_check
      _
    $region11: #{tpu_custom_call.1} parent=1 // pred_check_branch
      %14 = sbr.rel (0) target = $region13
    $region12: #{tpu_custom_call.1} parent=1 // pred_region
      _
    $region13: #{tpu_custom_call.1} parent=1 // pred_fallthru
      _
    %v15 = vld [vmem:[%s0] sm:$0xf]
    %v16 = vld [vmem:[%s1] sm:$0xff]
    %v17 = vld [vmem:[%s1 + $0x8] sm:$0xff]
    %v18 = vld [vmem:[%s1 + $0x10] sm:$0xff]
    %v19 = vld [vmem:[%s1 + $0x18] sm:$0xff]
    %v20 = vld [vmem:[%s1 + $0x20] sm:$0xff]
    %v21 = vld [vmem:[%s1 + $0x28] sm:$0xff]
    %v22 = vld [vmem:[%s1 + $0x30] sm:$0xff]
    %v23 = vld [vmem:[%s1 + $0x38] sm:$0xff]
    %v24 = vld [vmem:[%s1 + $0x40] sm:$0xff]
    %v25 = vld [vmem:[%s1 + $0x48] sm:$0xff]
    %v26 = vld [vmem:[%s1 + $0x50] sm:$0xff]
    %v27 = vld [vmem:[%s1 + $0x58] sm:$0xff]
    %v28 = vld [vmem:[%s1 + $0x60] sm:$0xff]
    %v29 = vld [vmem:[%s1 + $0x68] sm:$0xff]
    %v30 = vld [vmem:[%s1 + $0x70] sm:$0xff]
    %v31 = vld [vmem:[%s1 + $0x78] sm:$0xff]
    %v32 = vld [vmem:[%s1 + $0x80] sm:$0xff]
    %v33 = vld [vmem:[%s1 + $0x88] sm:$0xff]
    %v34 = vld [vmem:[%s1 + $0x90] sm:$0xff]
    %v35 = vld [vmem:[%s1 + $0x98] sm:$0xff]
    %v36 = vld [vmem:[%s1 + $0xa0] sm:$0xff]
    %v37 = vld [vmem:[%s1 + $0xa8] sm:$0xff]
    %v38 = vld [vmem:[%s1 + $0xb0] sm:$0xff]
    %v39 = vld [vmem:[%s1 + $0xb8] sm:$0xff]
    %v40 = vld [vmem:[%s1 + $0xc0] sm:$0xff]
    %v41 = vld [vmem:[%s1 + $0xc8] sm:$0xff]
    %v42 = vld [vmem:[%s1 + $0xd0] sm:$0xff]
    %v43 = vld [vmem:[%s1 + $0xd8] sm:$0xff]
    %v44 = vld [vmem:[%s1 + $0xe0] sm:$0xff]
    %v45 = vld [vmem:[%s1 + $0xe8] sm:$0xff]
    %v46 = vld [vmem:[%s1 + $0xf0] sm:$0xff]
    %v47 = vld [vmem:[%s1 + $0xf8] sm:$0xff]
    %v48 = vld [vmem:[%s2] sm:$0x1]
    %v50 = vperm.slane %v48, 0
    %53 = vst [vmem:[#allocation1] ss:$4 sm:$0xff] %v15
    %v54 = vld.sshfl [vmem:[#allocation1] sm:$0xff pattern:$0x73625140]
    %v55 = vld.sshfl [vmem:[#allocation1 + $0x8] sm:$0xff pattern:$0x73625140]
    %58 = vmatpush.msra.mxu0 %v31
    %59 = vmatpush.msra.mxu0 %v30
    %60 = vmatpush.msra.mxu0 %v29
    %61 = vmatpush.msra.mxu0 %v28
    %62 = vmatpush.msra.mxu0 %v27
    %63 = vmatpush.msra.mxu0 %v26
    %64 = vmatpush.msra.mxu0 %v25
    %65 = vmatpush.msra.mxu0 %v24
    %66 = vmatpush.msra.mxu0 %v23
    %67 = vmatpush.msra.mxu0 %v22
    %68 = vmatpush.msra.mxu0 %v21
    %69 = vmatpush.msra.mxu0 %v20
    %70 = vmatpush.msra.mxu0 %v19
    %71 = vmatpush.msra.mxu0 %v18
    %72 = vmatpush.msra.mxu0 %v17
    %73 = vmatpush.msra.mxu0 %v16
    %74 = vmatmul.f32.gmra.mxu0 %v54
    %v75 = vpop.f32.mrf.mxu0
    %v76 = vadd.f32 %v50, %v75
    %77 = vdwg.mxu0
    %78 = vmatpush.msra.mxu0 %v47
    %79 = vmatpush.msra.mxu0 %v46
    %80 = vmatpush.msra.mxu0 %v45
    %81 = vmatpush.msra.mxu0 %v44
    %82 = vmatpush.msra.mxu0 %v43
    %83 = vmatpush.msra.mxu0 %v42
    %84 = vmatpush.msra.mxu0 %v41
    %85 = vmatpush.msra.mxu0 %v40
    %86 = vmatpush.msra.mxu0 %v39
    %87 = vmatpush.msra.mxu0 %v38
    %88 = vmatpush.msra.mxu0 %v37
    %89 = vmatpush.msra.mxu0 %v36
    %90 = vmatpush.msra.mxu0 %v35
    %91 = vmatpush.msra.mxu0 %v34
    %92 = vmatpush.msra.mxu0 %v33
    %93 = vmatpush.msra.mxu0 %v32
    %94 = vmatmul.f32.gmra.mxu0 %v55
    %v95 = vpop.f32.mrf.mxu0
    %v96 = vadd.f32 %v76, %v95
    %97 = vdwg.mxu0
    %vm98 = vcmask 910336
    %99 = vst.msk [vmem:[#allocation2] sm:$0x3] %vm98, %v96
    // Predicated region
    $region14: #{tpu_custom_call.1} parent=1 // pred_check
      _
    $region15: #{tpu_custom_call.1} parent=1 // pred_check_branch
      %101 = sbr.rel (0) target = $region17
    $region16: #{tpu_custom_call.1} parent=1 // pred_region
      %103 = vsyncadd [#allocation3], 0
      %s105 = sshll.u32 [#allocation2], 4
      %s106 = int_to_ptr.vmem [resolvable:$true] %s105
      %s107 = sshll.u32 %s3, 4
      %s108 = int_to_ptr.hbm [resolvable:$true] %s107
      %110 = dma.vmem_to_hbm [thread:$0]  %s106, 32, %s108, [#allocation3]
    $region17: #{tpu_custom_call.1} parent=1 // pred_fallthru
      _
    // Predicated region
    $region18: #{tpu_custom_call.1} parent=1 // pred_check
      _
    $region19: #{tpu_custom_call.1} parent=1 // pred_check_branch
      %112 = sbr.rel (0) target = $region21
    $region20: #{tpu_custom_call.1} parent=1 // pred_region
      %114 = dma.done [#allocation3], 32
    $region21: #{tpu_custom_call.1} parent=1 // pred_fallthru
      _
    %115 = vsyncpa [#allocation3], 1

</llo_original>
